<compile_context>
chip_gen: v7x
topology: tpu7x:2x2x1
jax: 0.10.0
libtpu: 0.0.40
codegen_flags: <defaults>
</compile_context>

<pallas_src>
import math

import jax
import jax.numpy as jnp
from jax import lax
from jax.experimental import pallas as pl
from jax.experimental.pallas import tpu as pltpu


def make_local_generator_kernel(n_layers, depth_layers, compute_depth, has_rest):
    def kernel(*refs):
        it = iter(refs)
        x_ref = next(it)                                   # (1, Cin0, T)   input dtype
        w0_ref = next(it)                                  # (1, Chid, Cin0) bf16
        wrest_ref = next(it) if has_rest else None         # (1, L-1, Chid, Chid) bf16
        act_b_ref = next(it)                               # (L, Chid, 1)   f32
        feat_w_ref = next(it)                              # (Cout, Chid)   bf16 (rgb_scale*gain folded)
        feat_b_ref = next(it)                              # (Cout, 1)      f32
        depth_w_ref = next(it) if compute_depth else None  # (1, Chid)      bf16 (rgb_scale*gain folded)
        depth_b_ref = next(it) if compute_depth else None  # (1, 1)         f32
        feat_ref = next(it)                                # (1, Cout, T)
        depth_ref = next(it) if compute_depth else None    # (1, 1, T)      f32

        # Cast input to bf16 in-kernel (avoids a separate HBM cast pass).
        x = x_ref[0].astype(jnp.bfloat16)                  # (Cin0, T), lanes = spatial
        for i in range(n_layers):
            w = w0_ref[0] if i == 0 else wrest_ref[0, i - 1]     # (Chid, Cin_i) bf16
            y = lax.dot_general(w, x, (((1,), (0,)), ((), ())),
                                preferred_element_type=jnp.float32)  # (Chid, T) f32
            y = y + act_b_ref[i]                                      # FusedLeakyReLU bias
            # leaky_relu(0.2); the sqrt(2) gain is folded into downstream weights.
            x = jnp.maximum(y, 0.2 * y).astype(jnp.bfloat16)
            if compute_depth and i == depth_layers - 1:
                d = lax.dot_general(depth_w_ref[...], x, (((1,), (0,)), ((), ())),
                                    preferred_element_type=jnp.float32)  # (1, T)
                depth_ref[0] = (d + depth_b_ref[...]).astype(depth_ref.dtype)

        feat = lax.dot_general(feat_w_ref[...], x, (((1,), (0,)), ((), ())),
                               preferred_element_type=jnp.float32)        # (Cout, T)
        feat_ref[0] = (feat + feat_b_ref[...]).astype(feat_ref.dtype)

    return kernel


def _estimate_vmem_bytes(tile, in_ch, hid, out_ch, n_layers, compute_depth,
                         x_bytes, feat_bytes):
    # Double-buffered per-grid-step I/O blocks.
    io = 2 * (in_ch * tile * x_bytes + out_ch * tile * feat_bytes)
    if compute_depth:
        io += 2 * tile * 4
    # Per-batch weights (also double-buffered, tiny).
    w = (hid * in_ch * 2 + max(n_layers - 1, 0) * hid * hid * 2
         + n_layers * hid * 4 + out_ch * hid * 2 + out_ch * 4)
    if compute_depth:
        w += hid * 2 + 4
    # In-kernel live intermediates: y (f32), activation x (bf16, in + out of
    # the cast), feat accumulator (f32).
    scratch = hid * tile * (4 + 2 + 2) + out_ch * tile * 4
    return io + 2 * w + scratch


def _select_tile_hw(HW, B, in_ch, hid, out_ch, n_layers, compute_depth,
                    x_bytes, feat_bytes, budget_bytes):
    if HW % 128 != 0:
        return HW                     # lane constraint: tile must equal full HW
    cands = [t for t in range(128, HW + 1, 128) if HW % t == 0]
    cands.sort(reverse=True)
    feasible = [t for t in cands if _estimate_vmem_bytes(
        t, in_ch, hid, out_ch, n_layers, compute_depth, x_bytes, feat_bytes)
        <= budget_bytes]
    if not feasible:
        return cands[-1]
    if B == 1:
        # v7x megacore: prefer >= 2 grid steps so both TensorCores get work
        # (costs ~0.35us extra on single-TC chips, wins ~2x on v7x).
        multi = [t for t in feasible if HW // t >= 2]
        if multi:
            return multi[0]
    return feasible[0]


def local_generator_forward(x_nchw, latent, params, *, n_layers, depth_layers,
                            use_depth, style_dim, in_channel, hidden_channel,
                            out_channel, tile_hw=None, feat_dtype=jnp.float32,
                            vmem_budget_bytes=24 * 1024 * 1024):
    # TODO(synk): feat_dtype=jnp.bfloat16 halves the dominant feat writeback
    # traffic; enable only after validating downstream consumers' precision.
    B, C, H, W = x_nchw.shape
    assert C == in_channel
    HW = H * W
    compute_depth = use_depth and 1 <= depth_layers <= n_layers
    has_rest = n_layers > 1
    x_bytes = jnp.dtype(x_nchw.dtype).itemsize
    feat_bytes = jnp.dtype(feat_dtype).itemsize

    if tile_hw is None:
        tile_hw = _select_tile_hw(HW, B, in_channel, hidden_channel, out_channel,
                                  n_layers, compute_depth, x_bytes, feat_bytes,
                                  vmem_budget_bytes)
    assert HW % tile_hw == 0
    assert tile_hw == HW or tile_hw % 128 == 0, "HW tile must be lane-aligned (x128)"
    n_tiles = HW // tile_hw

    layer_in = [in_channel] + [hidden_channel] * (n_layers - 1)
    rgb_scale = 1.0 / math.sqrt(hidden_channel)
    inv_sqrt_sd = 1.0 / math.sqrt(style_dim)
    act_gain = math.sqrt(2.0)

    # ---- Hoisted per-batch modulation + demodulation (tiny, done once). ----
    lat = latent.astype(jnp.float32)
    mod_ws = []
    for i, cin in enumerate(layer_in):
        s = lat[:, i, :] @ params[f"mod_w_{i}"].T * inv_sqrt_sd + params[f"mod_b_{i}"]
        w = (1.0 / math.sqrt(cin)) * params[f"conv_w_{i}"][None, :, :] * s[:, None, :]
        demod = lax.rsqrt(jnp.sum(w * w, axis=2, keepdims=True) + 1e-8)
        w = w * demod
        if i > 0:
            w = w * act_gain                       # fold previous layer's sqrt(2) gain
        mod_ws.append(w.astype(jnp.bfloat16))      # (B, Chid, Cin_i)
    w0 = mod_ws[0]                                 # (B, Chid, Cin0)
    wrest = jnp.stack(mod_ws[1:], axis=1) if has_rest else None  # (B, L-1, Chid, Chid)

    act_b = jnp.stack([params[f"act_b_{i}"].reshape(hidden_channel)
                       for i in range(n_layers)], axis=0)
    act_b = act_b.astype(jnp.float32).reshape(n_layers, hidden_channel, 1)

    feat_w = (params["feat_w"] * (rgb_scale * act_gain)).astype(jnp.bfloat16)  # (Cout, Chid)
    feat_b = params["feat_b"].reshape(out_channel, 1).astype(jnp.float32)
    if compute_depth:
        depth_w = (params["depth_w"] * (rgb_scale * act_gain)).astype(jnp.bfloat16)  # (1, Chid)
        depth_b = params["depth_b"].reshape(1, 1).astype(jnp.float32)

    # Lane-dense layout: (B, C, HW).  bf16 cast happens inside the kernel.
    x = x_nchw.reshape(B, in_channel, HW)

    inputs = [x, w0]
    in_specs = [
        pl.BlockSpec((1, in_channel, tile_hw), lambda b, t: (b, 0, t)),
        pl.BlockSpec((1, hidden_channel, in_channel), lambda b, t: (b, 0, 0)),
    ]
    if has_rest:
        inputs.append(wrest)
        in_specs.append(pl.BlockSpec(
            (1, n_layers - 1, hidden_channel, hidden_channel),
            lambda b, t: (b, 0, 0, 0)))
    inputs += [act_b, feat_w, feat_b]
    in_specs += [
        pl.BlockSpec((n_layers, hidden_channel, 1), lambda b, t: (0, 0, 0)),
        pl.BlockSpec((out_channel, hidden_channel), lambda b, t: (0, 0)),
        pl.BlockSpec((out_channel, 1), lambda b, t: (0, 0)),
    ]
    if compute_depth:
        inputs += [depth_w, depth_b]
        in_specs += [
            pl.BlockSpec((1, hidden_channel), lambda b, t: (0, 0)),
            pl.BlockSpec((1, 1), lambda b, t: (0, 0)),
        ]

    feat_struct = jax.ShapeDtypeStruct((B, out_channel, HW), feat_dtype)
    feat_spec = pl.BlockSpec((1, out_channel, tile_hw), lambda b, t: (b, 0, t))
    if compute_depth:
        out_shape = (feat_struct, jax.ShapeDtypeStruct((B, 1, HW), jnp.float32))
        out_specs = (feat_spec, pl.BlockSpec((1, 1, tile_hw), lambda b, t: (b, 0, t)))
    else:
        # Depth branch never taken: drop the output from the kernel entirely.
        out_shape = feat_struct
        out_specs = feat_spec

    kernel = make_local_generator_kernel(n_layers, depth_layers, compute_depth, has_rest)

    result = pl.pallas_call(
        kernel,
        out_shape=out_shape,
        grid=(B, n_tiles),                 # b outer, t inner: weights DMA'd once per batch
        in_specs=in_specs,
        out_specs=out_specs,
        compiler_params=pltpu.CompilerParams(
            dimension_semantics=("parallel", "parallel"),
            vmem_limit_bytes=48 * 1024 * 1024),
    )(*inputs)

    if compute_depth:
        feat, depth = result
    else:
        feat = result
        depth = jnp.zeros((B, 1, HW), jnp.float32)

    return feat.reshape(B, out_channel, H, W), depth.reshape(B, 1, H, W)


def reference_forward(x_nchw, latent, params, *, n_layers, depth_layers,
                      use_depth, style_dim, in_channel, hidden_channel,
                      out_channel):
    """Pure-f32 plain-JAX reference: the module's exact forward semantics."""
    B, C, H, W = x_nchw.shape
    HW = H * W
    layer_in = [in_channel] + [hidden_channel] * (n_layers - 1)
    rgb_scale = 1.0 / math.sqrt(hidden_channel)

    x = x_nchw.reshape(B, C, HW).astype(jnp.float32)
    depth = jnp.zeros((B, 1, HW), jnp.float32)
    for i, cin in enumerate(layer_in):
        s = latent[:, i, :] @ params[f"mod_w_{i}"].T / math.sqrt(style_dim)
        s = s + params[f"mod_b_{i}"]                                   # (B, Cin)
        w = (1.0 / math.sqrt(cin)) * params[f"conv_w_{i}"][None] * s[:, None, :]
        demod = 1.0 / jnp.sqrt(jnp.sum(w * w, axis=2, keepdims=True) + 1e-8)
        w = w * demod                                                  # (B, Chid, Cin)
        y = jnp.einsum("boc,bcp->bop", w, x)
        y = y + params[f"act_b_{i}"].reshape(1, hidden_channel, 1)
        x = jnp.where(y >= 0, y, 0.2 * y) * math.sqrt(2.0)
        if use_depth and i == depth_layers - 1:
            depth = jnp.einsum("oc,bcp->bop", params["depth_w"] * rgb_scale, x) \
                    + params["depth_b"].reshape(1, 1, 1)
    feat = jnp.einsum("oc,bcp->bop", params["feat_w"] * rgb_scale, x) \
           + params["feat_b"].reshape(1, out_channel, 1)
    return feat.reshape(B, out_channel, H, W), depth.reshape(B, 1, H, W)


def reference_forward_matched(x_nchw, latent, params, *, n_layers, depth_layers,
                              use_depth, style_dim, in_channel, hidden_channel,
                              out_channel):
    """Precision-matched reference: mirrors the kernel's bf16 rounding points
    (bf16 matmul operands, f32 accumulate/pointwise, gain folded into the
    downstream weights)."""
    def rb(a):  # round to bf16, compute in f32
        return a.astype(jnp.bfloat16).astype(jnp.float32)

    B, C, H, W = x_nchw.shape
    HW = H * W
    layer_in = [in_channel] + [hidden_channel] * (n_layers - 1)
    rgb_scale = 1.0 / math.sqrt(hidden_channel)
    act_gain = math.sqrt(2.0)
    compute_depth = use_depth and 1 <= depth_layers <= n_layers

    x = rb(x_nchw.reshape(B, C, HW))
    depth = jnp.zeros((B, 1, HW), jnp.float32)
    for i, cin in enumerate(layer_in):
        s = latent[:, i, :] @ params[f"mod_w_{i}"].T / math.sqrt(style_dim)
        s = s + params[f"mod_b_{i}"]
        w = (1.0 / math.sqrt(cin)) * params[f"conv_w_{i}"][None] * s[:, None, :]
        demod = 1.0 / jnp.sqrt(jnp.sum(w * w, axis=2, keepdims=True) + 1e-8)
        w = w * demod
        if i > 0:
            w = w * act_gain
        w = rb(w)
        y = jnp.einsum("boc,bcp->bop", w, x)
        y = y + params[f"act_b_{i}"].reshape(1, hidden_channel, 1)
        x = rb(jnp.maximum(y, 0.2 * y))
        if compute_depth and i == depth_layers - 1:
            dw = rb(params["depth_w"] * (rgb_scale * act_gain))
            depth = jnp.einsum("oc,bcp->bop", dw, x) + params["depth_b"].reshape(1, 1, 1)
    fw = rb(params["feat_w"] * (rgb_scale * act_gain))
    feat = jnp.einsum("oc,bcp->bop", fw, x) + params["feat_b"].reshape(1, out_channel, 1)
    return feat.reshape(B, out_channel, H, W), depth.reshape(B, 1, H, W)


if __name__ == "__main__":
    B, H, W = 2, 16, 16
    in_channel, hidden_channel, out_channel = 8, 32, 16
    style_dim = 16
    n_layers, depth_layers = 4, 3

    key = jax.random.PRNGKey(0)
    keys = iter(jax.random.split(key, 64))
    layer_in = [in_channel] + [hidden_channel] * (n_layers - 1)

    params = {}
    for i, cin in enumerate(layer_in):
        params[f"mod_w_{i}"] = jax.random.normal(next(keys), (cin, style_dim), jnp.float32)
        params[f"mod_b_{i}"] = jnp.ones((1, cin), jnp.float32)              # EqualLinear bias_init=1
        params[f"conv_w_{i}"] = jax.random.normal(next(keys), (hidden_channel, cin), jnp.float32)
        params[f"act_b_{i}"] = jnp.zeros((1, hidden_channel), jnp.float32)  # FusedLeakyReLU bias
    params["feat_w"] = jax.random.normal(next(keys), (out_channel, hidden_channel), jnp.float32)
    params["feat_b"] = jnp.zeros((1, out_channel), jnp.float32)
    params["depth_w"] = jax.random.normal(next(keys), (1, hidden_channel), jnp.float32)
    params["depth_b"] = jnp.zeros((1, 1), jnp.float32)

    x = jax.random.normal(next(keys), (B, in_channel, H, W), jnp.float32)
    latent = jax.random.normal(next(keys), (B, n_layers, style_dim), jnp.float32)

    cfg = dict(n_layers=n_layers, depth_layers=depth_layers,
               style_dim=style_dim, in_channel=in_channel,
               hidden_channel=hidden_channel, out_channel=out_channel)

    # --- Case 1: use_depth=True, auto tile selection (HW=256 -> single tile). ---
    feat, depth = local_generator_forward(x, latent, params, use_depth=True, **cfg)
    jax.block_until_ready((feat, depth))
    feat_m, depth_m = reference_forward_matched(x, latent, params, use_depth=True, **cfg)
    feat_r, depth_r = reference_forward(x, latent, params, use_depth=True, **cfg)
    assert feat.shape == (B, out_channel, H, W) and depth.shape == (B, 1, H, W)
    assert jnp.allclose(feat, feat_m, rtol=1e-2, atol=1e-2), "feat mismatch (bf16-matched ref)"
    assert jnp.allclose(depth, depth_m, rtol=1e-2, atol=1e-2), "depth mismatch (bf16-matched ref)"
    assert jnp.allclose(feat, feat_r, rtol=1e-1, atol=1e-1), "feat mismatch (f32 ref)"
    assert jnp.allclose(depth, depth_r, rtol=1e-1, atol=1e-1), "depth mismatch (f32 ref)"

    # --- Case 2: explicit tile_hw=128 -> grid (B, 2): exercises the tiled spatial axis. ---
    feat2, depth2 = local_generator_forward(x, latent, params, use_depth=True,
                                            tile_hw=128, **cfg)
    jax.block_until_ready((feat2, depth2))
    assert jnp.allclose(feat2, feat_m, rtol=1e-2, atol=1e-2), "feat mismatch (tiled)"
    assert jnp.allclose(depth2, depth_m, rtol=1e-2, atol=1e-2), "depth mismatch (tiled)"

    # --- Case 3: use_depth=False -> depth output dropped from the kernel, zeros returned. ---
    feat3, depth3 = local_generator_forward(x, latent, params, use_depth=False, **cfg)
    jax.block_until_ready((feat3, depth3))
    feat3_m, _ = reference_forward_matched(x, latent, params, use_depth=False, **cfg)
    assert jnp.allclose(feat3, feat3_m, rtol=1e-2, atol=1e-2), "feat mismatch (no depth)"
    assert jnp.all(depth3 == 0.0), "depth must be zeros when use_depth=False"

    print("KERNEL_OK")
</pallas_src>

<mosaic_0001>
module attributes {stable_mosaic.version = 11 : i64} {
  func.func @kernel(%arg0: i32, %arg1: i32, %arg2: memref<1x8x256xf32, #tpu.memory_space<vmem>>, %arg3: memref<1x32x8xbf16, #tpu.memory_space<vmem>>, %arg4: memref<1x3x32x32xbf16, #tpu.memory_space<vmem>>, %arg5: memref<4x32x1xf32, #tpu.memory_space<vmem>>, %arg6: memref<16x32xbf16, #tpu.memory_space<vmem>>, %arg7: memref<16x1xf32, #tpu.memory_space<vmem>>, %arg8: memref<1x32xbf16, #tpu.memory_space<vmem>>, %arg9: memref<1x1xf32, #tpu.memory_space<vmem>>, %arg10: memref<1x16x256xf32, #tpu.memory_space<vmem>>, %arg11: memref<1x1x256xf32, #tpu.memory_space<vmem>>) attributes {dimension_semantics = [#tpu.dimension_semantics<parallel>, #tpu.dimension_semantics<parallel>], iteration_bounds = array<i64: 2, 1>, scalar_prefetch = 0 : i64, scratch_operands = 0 : i64, tpu.core_type = #tpu.core_type<tc>, window_params = [{transform_indices = @transform_0, window_bounds = array<i64: 1, 8, 256>}, {transform_indices = @transform_1, window_bounds = array<i64: 1, 32, 8>}, {transform_indices = @transform_2, window_bounds = array<i64: 1, 3, 32, 32>}, {pipeline_mode = #tpu.pipeline_mode<synchronous>, transform_indices = @transform_3, window_bounds = array<i64: 4, 32, 1>}, {pipeline_mode = #tpu.pipeline_mode<synchronous>, transform_indices = @transform_4, window_bounds = array<i64: 16, 32>}, {pipeline_mode = #tpu.pipeline_mode<synchronous>, transform_indices = @transform_5, window_bounds = array<i64: 16, 1>}, {pipeline_mode = #tpu.pipeline_mode<synchronous>, transform_indices = @transform_6, window_bounds = array<i64: 1, 32>}, {pipeline_mode = #tpu.pipeline_mode<synchronous>, transform_indices = @transform_7, window_bounds = array<i64: 1, 1>}, {transform_indices = @transform_8, window_bounds = array<i64: 1, 16, 256>}, {transform_indices = @transform_9, window_bounds = array<i64: 1, 1, 256>}]} {
    %c0 = arith.constant 0 : index
    %c0_0 = arith.constant 0 : index
    %c0_1 = arith.constant 0 : index
    %0 = vector.load %arg2[%c0, %c0_0, %c0_1] : memref<1x8x256xf32, #tpu.memory_space<vmem>>, vector<1x8x256xf32>
    %1 = vector.shape_cast %0 : vector<1x8x256xf32> to vector<8x256xf32>
    %2 = arith.truncf %1 : vector<8x256xf32> to vector<8x256xbf16>
    %c0_2 = arith.constant 0 : index
    %c0_3 = arith.constant 0 : index
    %c0_4 = arith.constant 0 : index
    %3 = vector.load %arg3[%c0_2, %c0_3, %c0_4] : memref<1x32x8xbf16, #tpu.memory_space<vmem>>, vector<1x32x8xbf16>
    %4 = vector.shape_cast %3 : vector<1x32x8xbf16> to vector<32x8xbf16>
    %cst = arith.constant dense<0.000000e+00> : vector<32x256xf32>
    %5 = tpu.matmul %4, %2, %cst {dimension_numbers = #tpu.dot_dimension_numbers<[1], [0], [0], [1], [0, 0, 1, 1], [], []>} : vector<32x8xbf16>, vector<8x256xbf16>, vector<32x256xf32> -> vector<32x256xf32>
    %c0_5 = arith.constant 0 : index
    %c0_6 = arith.constant 0 : index
    %c0_7 = arith.constant 0 : index
    %6 = vector.load %arg5[%c0_5, %c0_6, %c0_7] : memref<4x32x1xf32, #tpu.memory_space<vmem>>, vector<1x32x1xf32>
    %7 = vector.shape_cast %6 : vector<1x32x1xf32> to vector<32x1xf32>
    %8 = vector.broadcast %7 : vector<32x1xf32> to vector<32x256xf32>
    %9 = arith.addf %5, %8 : vector<32x256xf32>
    %cst_8 = arith.constant 2.000000e-01 : f32
    %10 = vector.broadcast %cst_8 : f32 to vector<32x256xf32>
    %11 = arith.mulf %10, %9 : vector<32x256xf32>
    %12 = arith.maximumf %9, %11 : vector<32x256xf32>
    %13 = arith.truncf %12 : vector<32x256xf32> to vector<32x256xbf16>
    %c0_9 = arith.constant 0 : index
    %c0_10 = arith.constant 0 : index
    %c0_11 = arith.constant 0 : index
    %c0_12 = arith.constant 0 : index
    %14 = vector.load %arg4[%c0_9, %c0_10, %c0_11, %c0_12] : memref<1x3x32x32xbf16, #tpu.memory_space<vmem>>, vector<1x1x32x32xbf16>
    %15 = vector.shape_cast %14 : vector<1x1x32x32xbf16> to vector<32x32xbf16>
    %cst_13 = arith.constant dense<0.000000e+00> : vector<32x256xf32>
    %16 = tpu.matmul %15, %13, %cst_13 {dimension_numbers = #tpu.dot_dimension_numbers<[1], [0], [0], [1], [0, 0, 1, 1], [], []>} : vector<32x32xbf16>, vector<32x256xbf16>, vector<32x256xf32> -> vector<32x256xf32>
    %c1 = arith.constant 1 : index
    %c0_14 = arith.constant 0 : index
    %c0_15 = arith.constant 0 : index
    %17 = vector.load %arg5[%c1, %c0_14, %c0_15] : memref<4x32x1xf32, #tpu.memory_space<vmem>>, vector<1x32x1xf32>
    %18 = vector.shape_cast %17 : vector<1x32x1xf32> to vector<32x1xf32>
    %19 = vector.broadcast %18 : vector<32x1xf32> to vector<32x256xf32>
    %20 = arith.addf %16, %19 : vector<32x256xf32>
    %cst_16 = arith.constant 2.000000e-01 : f32
    %21 = vector.broadcast %cst_16 : f32 to vector<32x256xf32>
    %22 = arith.mulf %21, %20 : vector<32x256xf32>
    %23 = arith.maximumf %20, %22 : vector<32x256xf32>
    %24 = arith.truncf %23 : vector<32x256xf32> to vector<32x256xbf16>
    %c0_17 = arith.constant 0 : index
    %c1_18 = arith.constant 1 : index
    %c0_19 = arith.constant 0 : index
    %c0_20 = arith.constant 0 : index
    %25 = vector.load %arg4[%c0_17, %c1_18, %c0_19, %c0_20] : memref<1x3x32x32xbf16, #tpu.memory_space<vmem>>, vector<1x1x32x32xbf16>
    %26 = vector.shape_cast %25 : vector<1x1x32x32xbf16> to vector<32x32xbf16>
    %cst_21 = arith.constant dense<0.000000e+00> : vector<32x256xf32>
    %27 = tpu.matmul %26, %24, %cst_21 {dimension_numbers = #tpu.dot_dimension_numbers<[1], [0], [0], [1], [0, 0, 1, 1], [], []>} : vector<32x32xbf16>, vector<32x256xbf16>, vector<32x256xf32> -> vector<32x256xf32>
    %c2 = arith.constant 2 : index
    %c0_22 = arith.constant 0 : index
    %c0_23 = arith.constant 0 : index
    %28 = vector.load %arg5[%c2, %c0_22, %c0_23] : memref<4x32x1xf32, #tpu.memory_space<vmem>>, vector<1x32x1xf32>
    %29 = vector.shape_cast %28 : vector<1x32x1xf32> to vector<32x1xf32>
    %30 = vector.broadcast %29 : vector<32x1xf32> to vector<32x256xf32>
    %31 = arith.addf %27, %30 : vector<32x256xf32>
    %cst_24 = arith.constant 2.000000e-01 : f32
    %32 = vector.broadcast %cst_24 : f32 to vector<32x256xf32>
    %33 = arith.mulf %32, %31 : vector<32x256xf32>
    %34 = arith.maximumf %31, %33 : vector<32x256xf32>
    %35 = arith.truncf %34 : vector<32x256xf32> to vector<32x256xbf16>
    %c0_25 = arith.constant 0 : index
    %c0_26 = arith.constant 0 : index
    %36 = vector.load %arg8[%c0_25, %c0_26] : memref<1x32xbf16, #tpu.memory_space<vmem>>, vector<1x32xbf16>
    %cst_27 = arith.constant dense<0.000000e+00> : vector<1x256xf32>
    %37 = tpu.matmul %36, %35, %cst_27 {dimension_numbers = #tpu.dot_dimension_numbers<[1], [0], [0], [1], [0, 0, 1, 1], [], []>} : vector<1x32xbf16>, vector<32x256xbf16>, vector<1x256xf32> -> vector<1x256xf32>
    %c0_28 = arith.constant 0 : index
    %c0_29 = arith.constant 0 : index
    %38 = vector.load %arg9[%c0_28, %c0_29] : memref<1x1xf32, #tpu.memory_space<vmem>>, vector<1x1xf32>
    %39 = vector.broadcast %38 : vector<1x1xf32> to vector<1x256xf32>
    %40 = arith.addf %37, %39 : vector<1x256xf32>
    %c0_30 = arith.constant 0 : index
    %c0_31 = arith.constant 0 : index
    %c0_32 = arith.constant 0 : index
    %41 = vector.load %arg11[%c0_30, %c0_31, %c0_32] : memref<1x1x256xf32, #tpu.memory_space<vmem>>, vector<1x1x256xf32>
    %42 = vector.shape_cast %41 : vector<1x1x256xf32> to vector<1x256xf32>
    %43 = vector.shape_cast %40 : vector<1x256xf32> to vector<1x1x256xf32>
    tpu.vector_store %arg11[%c0_30, %c0_31, %c0_32], %43 {strides = array<i32>} : memref<1x1x256xf32, #tpu.memory_space<vmem>>, vector<1x1x256xf32>,
    %c0_33 = arith.constant 0 : index
    %c2_34 = arith.constant 2 : index
    %c0_35 = arith.constant 0 : index
    %c0_36 = arith.constant 0 : index
    %44 = vector.load %arg4[%c0_33, %c2_34, %c0_35, %c0_36] : memref<1x3x32x32xbf16, #tpu.memory_space<vmem>>, vector<1x1x32x32xbf16>
    %45 = vector.shape_cast %44 : vector<1x1x32x32xbf16> to vector<32x32xbf16>
    %cst_37 = arith.constant dense<0.000000e+00> : vector<32x256xf32>
    %46 = tpu.matmul %45, %35, %cst_37 {dimension_numbers = #tpu.dot_dimension_numbers<[1], [0], [0], [1], [0, 0, 1, 1], [], []>} : vector<32x32xbf16>, vector<32x256xbf16>, vector<32x256xf32> -> vector<32x256xf32>
    %c3 = arith.constant 3 : index
    %c0_38 = arith.constant 0 : index
    %c0_39 = arith.constant 0 : index
    %47 = vector.load %arg5[%c3, %c0_38, %c0_39] : memref<4x32x1xf32, #tpu.memory_space<vmem>>, vector<1x32x1xf32>
    %48 = vector.shape_cast %47 : vector<1x32x1xf32> to vector<32x1xf32>
    %49 = vector.broadcast %48 : vector<32x1xf32> to vector<32x256xf32>
    %50 = arith.addf %46, %49 : vector<32x256xf32>
    %cst_40 = arith.constant 2.000000e-01 : f32
    %51 = vector.broadcast %cst_40 : f32 to vector<32x256xf32>
    %52 = arith.mulf %51, %50 : vector<32x256xf32>
    %53 = arith.maximumf %50, %52 : vector<32x256xf32>
    %54 = arith.truncf %53 : vector<32x256xf32> to vector<32x256xbf16>
    %c0_41 = arith.constant 0 : index
    %c0_42 = arith.constant 0 : index
    %55 = vector.load %arg6[%c0_41, %c0_42] : memref<16x32xbf16, #tpu.memory_space<vmem>>, vector<16x32xbf16>
    %cst_43 = arith.constant dense<0.000000e+00> : vector<16x256xf32>
    %56 = tpu.matmul %55, %54, %cst_43 {dimension_numbers = #tpu.dot_dimension_numbers<[1], [0], [0], [1], [0, 0, 1, 1], [], []>} : vector<16x32xbf16>, vector<32x256xbf16>, vector<16x256xf32> -> vector<16x256xf32>
    %c0_44 = arith.constant 0 : index
    %c0_45 = arith.constant 0 : index
    %57 = vector.load %arg7[%c0_44, %c0_45] : memref<16x1xf32, #tpu.memory_space<vmem>>, vector<16x1xf32>
    %58 = vector.broadcast %57 : vector<16x1xf32> to vector<16x256xf32>
    %59 = arith.addf %56, %58 : vector<16x256xf32>
    %c0_46 = arith.constant 0 : index
    %c0_47 = arith.constant 0 : index
    %c0_48 = arith.constant 0 : index
    %60 = vector.load %arg10[%c0_46, %c0_47, %c0_48] : memref<1x16x256xf32, #tpu.memory_space<vmem>>, vector<1x16x256xf32>
    %61 = vector.shape_cast %60 : vector<1x16x256xf32> to vector<16x256xf32>
    %62 = vector.shape_cast %59 : vector<16x256xf32> to vector<1x16x256xf32>
    tpu.vector_store %arg10[%c0_46, %c0_47, %c0_48], %62 {strides = array<i32>} : memref<1x16x256xf32, #tpu.memory_space<vmem>>, vector<1x16x256xf32>,
    return
  }
  func.func @transform_0(%arg0: i32, %arg1: i32) -> (i32, i32, i32) {
    %c0_i32 = arith.constant 0 : i32
    %c0_i32_0 = arith.constant 0 : i32
    return %arg0, %c0_i32, %arg1 : i32, i32, i32
  }
  func.func @transform_1(%arg0: i32, %arg1: i32) -> (i32, i32, i32) {
    %c0_i32 = arith.constant 0 : i32
    %c0_i32_0 = arith.constant 0 : i32
    %c0_i32_1 = arith.constant 0 : i32
    return %arg0, %c0_i32, %c0_i32_0 : i32, i32, i32
  }
  func.func @transform_2(%arg0: i32, %arg1: i32) -> (i32, i32, i32, i32) {
    %c0_i32 = arith.constant 0 : i32
    %c0_i32_0 = arith.constant 0 : i32
    %c0_i32_1 = arith.constant 0 : i32
    %c0_i32_2 = arith.constant 0 : i32
    return %arg0, %c0_i32, %c0_i32_0, %c0_i32_1 : i32, i32, i32, i32
  }
  func.func @transform_3(%arg0: i32, %arg1: i32) -> (i32, i32, i32) {
    %c0_i32 = arith.constant 0 : i32
    %c0_i32_0 = arith.constant 0 : i32
    %c0_i32_1 = arith.constant 0 : i32
    %c0_i32_2 = arith.constant 0 : i32
    return %c0_i32, %c0_i32_0, %c0_i32_1 : i32, i32, i32
  }
  func.func @transform_4(%arg0: i32, %arg1: i32) -> (i32, i32) {
    %c0_i32 = arith.constant 0 : i32
    %c0_i32_0 = arith.constant 0 : i32
    %c0_i32_1 = arith.constant 0 : i32
    return %c0_i32, %c0_i32_0 : i32, i32
  }
  func.func @transform_5(%arg0: i32, %arg1: i32) -> (i32, i32) {
    %c0_i32 = arith.constant 0 : i32
    %c0_i32_0 = arith.constant 0 : i32
    %c0_i32_1 = arith.constant 0 : i32
    return %c0_i32, %c0_i32_0 : i32, i32
  }
  func.func @transform_6(%arg0: i32, %arg1: i32) -> (i32, i32) {
    %c0_i32 = arith.constant 0 : i32
    %c0_i32_0 = arith.constant 0 : i32
    %c0_i32_1 = arith.constant 0 : i32
    return %c0_i32, %c0_i32_0 : i32, i32
  }
  func.func @transform_7(%arg0: i32, %arg1: i32) -> (i32, i32) {
    %c0_i32 = arith.constant 0 : i32
    %c0_i32_0 = arith.constant 0 : i32
    %c0_i32_1 = arith.constant 0 : i32
    return %c0_i32, %c0_i32_0 : i32, i32
  }
  func.func @transform_8(%arg0: i32, %arg1: i32) -> (i32, i32, i32) {
    %c0_i32 = arith.constant 0 : i32
    %c0_i32_0 = arith.constant 0 : i32
    return %arg0, %c0_i32, %arg1 : i32, i32, i32
  }
  func.func @transform_9(%arg0: i32, %arg1: i32) -> (i32, i32, i32) {
    %c0_i32 = arith.constant 0 : i32
    %c0_i32_0 = arith.constant 0 : i32
    return %arg0, %c0_i32, %arg1 : i32, i32, i32
  }
}

</mosaic_0001>

<llo_original>
// kernel: tpu_custom_call.1
$region0: #{tpu_custom_call.1}
  #allocation0 [shape = 'u32[]', space=smem, size = 0x4, offset = 0x4, fixed_abs, tag = 'smem constant byte address 0x4 - core index']
  #allocation1 [shape = 'u32[144,128]{1,0:T(1,128)}', space=vmem, size = 0x12000, scoped, tag = 'internal scratch']
  #allocation2 [shape = 'f32[1,1]{1,0:T(1,128)S(1)}', space=vmem, size = 0x200, scoped, tag = 'scoped memory for tpu_custom_call.1']
  %s0 = inlined_call_operand.vmem [shape: f32[2,8,256], index: 0, kind: input, shape index: {}]
  %s1 = inlined_call_operand.vmem [shape: bf16[2,32,8], index: 1, kind: input, shape index: {}]
  %s2 = inlined_call_operand.vmem [shape: bf16[2,3,32,32], index: 2, kind: input, shape index: {}]
  %s3 = inlined_call_operand.vmem [shape: f32[4,32,1], index: 3, kind: input, shape index: {}]
  %s4 = inlined_call_operand.vmem [shape: bf16[16,32], index: 4, kind: input, shape index: {}]
  %s5 = inlined_call_operand.vmem [shape: f32[16,1], index: 5, kind: input, shape index: {}]
  %s6 = inlined_call_operand.vmem [shape: bf16[1,32], index: 6, kind: input, shape index: {}]
  %s7 = inlined_call_operand.<no memory space> [shape: f32[1,1], index: 7, kind: input, shape index: {}]
  %s8 = inlined_call_operand.hbm [shape: f32[2,16,256], index: 8, kind: output, shape index: {0}]
  %s9 = inlined_call_operand.hbm [shape: f32[2,1,256], index: 9, kind: output, shape index: {1}]
  %10 = xla_tuple %s8, %s9
  %s11 = sld [smem:[#allocation0]]
  $region73: #{tpu_custom_call.1} parent=0
    _
  %s13 = ssub.s32 1, %s11
  %s14 = scalar_select 0, %s13, %s11
  %v15 = vstv %s7
  %16 = vst [vmem:[#allocation2] sm:$0x1] %v15
  $region1: #{tpu_custom_call.1} parent=0
    #allocation3 [shape = 'u8[32768]{0}', space=vmem, size = 0x8000, scoped, tag = 'output window, operand 0']
    #allocation4 [shape = 's32[2]{0}', space=sflag, size = 0x8, scoped, tag = 'scoped memory for tpu_custom_call.1']
    #allocation5 [shape = 'u8[2048]{0}', space=vmem, size = 0x800, scoped, tag = 'output window, operand 1']
    #allocation6 [shape = 's32[2]{0}', space=sflag, size = 0x8, scoped, tag = 'scoped memory for tpu_custom_call.1']
    %17 = vsyncpa [#allocation4], 0
    %s18 = scalar_lea.sflag [#allocation4], 1
    %19 = vsyncpa %s18, 0
    %20 = vsyncpa [#allocation6], 0
    %s21 = scalar_lea.sflag [#allocation6], 1
    %22 = vsyncpa %s21, 0
    loop: start=0, step=1, limit=4
    $region2: #{tpu_custom_call.1} parent=1 // loop_pre_header
      _
    $region3: #{tpu_custom_call.1} parent=1 // loop_header
      %s24 = sphi 0, %s28
      %p25 = scmp.ge.s32.totalorder %s24, 4
      %s31 = sphi 0, %s43
      %s32 = sphi 0, %s39
      %s33 = sphi 0, %s31
      %s34 = sphi 0, %s32
      %s35 = sphi 0, %s33
      %s36 = sphi 0, %s34
      %s48 = sphi 0, %s50
      %s51 = sphi 0, %s48
      %s52 = sphi 0, %s51
      %s68 = sphi 0, %s52
      %s74 = sphi 0, %s76
      %s77 = sphi 0, %s74
      %s78 = sphi 0, %s77
      %s94 = sphi 0, %s78
      %s100 = sphi 0, %s102
      %s103 = sphi 0, %s100
      %s104 = sphi 0, %s103
      %s120 = sphi 0, %s104
      %s124 = sphi 0, %s124
      %s126 = sphi 0, %s124
      %s127 = sphi 0, %s126
      %s141 = sphi 0, %s127
      %s145 = sphi 0, %s145
      %s147 = sphi 0, %s145
      %s148 = sphi 0, %s147
      %s162 = sphi 0, %s148
      %s166 = sphi 0, %s166
      %s168 = sphi 0, %s166
      %s169 = sphi 0, %s168
      %s183 = sphi 0, %s169
      %s187 = sphi 0, %s187
      %s189 = sphi 0, %s187
      %s190 = sphi 0, %s189
      %s204 = sphi 0, %s190
      %s208 = sphi 0, %s208
      %s210 = sphi 0, %s208
      %s211 = sphi 0, %s210
      %s225 = sphi 0, %s211
      %s233 = sphi 0, %s235
      %s236 = sphi 0, %s233
      %s237 = sphi 0, %s236
      %s253 = sphi 0, %s237
      %s261 = sphi 0, %s263
      %s264 = sphi 0, %s261
      %s265 = sphi 0, %s264
      %s281 = sphi 0, %s265
    $region4: #{tpu_custom_call.1} parent=1 // loop_header_branch
      %27 = sbr.rel (%p25) target = $region8
    $region5: #{tpu_custom_call.1} parent=1 // loop_body
      %s29 = ssub.s32 %s24, 1
      %s30 = ssub.s32 %s24, 2
      %s37 = sadd.s32 1, %s32
      %p38 = scmp.ge.s32.totalorder %s37, 1
      %s39 = scalar_select %p38, 0, %s37
      %s40 = sadd.s32 1, %s31
      %s41 = scalar_select %p38, %s40, %s31
      %p42 = scmp.ge.s32.totalorder %s41, 2
      %s43 = scalar_select %p42, 0, %s41
      %s44 = ssub.s32 %s31, %s43
      %s45 = ssub.s32 %s32, %s39
      %s46 = sor.u32 %s44, %s45
      %p47 = scmp.eq.s32.totalorder %s46, 0
      %s49 = sadd.s32 %s48, 1
      %s50 = scalar_select %p47, %s48, %s49
      %p53 = pneg %p47
      %p54 = scmp.eq.s32.totalorder %s24, 1
      %p55 = por %p53, %p54
      %p56 = scmp.ne.s32.totalorder %s48, %s51
      %p57 = scmp.eq.s32.totalorder %s24, 0
      %p58 = por %p56, %p57
      %p59 = scmp.ne.s32.totalorder %s48, %s51
      %p60 = scmp.eq.s32.totalorder %s29, 1
      %p61 = por %p59, %p60
      %p62 = scmp.ne.s32.totalorder %s51, %s52
      %p63 = scmp.eq.s32.totalorder %s29, 0
      %p64 = por %p62, %p63
      %p65 = scmp.ne.s32.totalorder %s51, %s52
      %p66 = scmp.eq.s32.totalorder %s30, 1
      %p67 = por %p65, %p66
      %p69 = scmp.ne.s32.totalorder %s52, %s68
      %p70 = scmp.eq.s32.totalorder %s30, 0
      %p71 = por %p69, %p70
      %s72 = ssub.s32 %s31, %s43
      %p73 = scmp.eq.s32.totalorder %s72, 0
      %s75 = sadd.s32 %s74, 1
      %s76 = scalar_select %p73, %s74, %s75
      %p79 = pneg %p73
      %p80 = scmp.eq.s32.totalorder %s24, 1
      %p81 = por %p79, %p80
      %p82 = scmp.ne.s32.totalorder %s74, %s77
      %p83 = scmp.eq.s32.totalorder %s24, 0
      %p84 = por %p82, %p83
      %p85 = scmp.ne.s32.totalorder %s74, %s77
      %p86 = scmp.eq.s32.totalorder %s29, 1
      %p87 = por %p85, %p86
      %p88 = scmp.ne.s32.totalorder %s77, %s78
      %p89 = scmp.eq.s32.totalorder %s29, 0
      %p90 = por %p88, %p89
      %p91 = scmp.ne.s32.totalorder %s77, %s78
      %p92 = scmp.eq.s32.totalorder %s30, 1
      %p93 = por %p91, %p92
      %p95 = scmp.ne.s32.totalorder %s78, %s94
      %p96 = scmp.eq.s32.totalorder %s30, 0
      %p97 = por %p95, %p96
      %s98 = ssub.s32 %s31, %s43
      %p99 = scmp.eq.s32.totalorder %s98, 0
      %s101 = sadd.s32 %s100, 1
      %s102 = scalar_select %p99, %s100, %s101
      %p105 = pneg %p99
      %p106 = scmp.eq.s32.totalorder %s24, 1
      %p107 = por %p105, %p106
      %p108 = scmp.ne.s32.totalorder %s100, %s103
      %p109 = scmp.eq.s32.totalorder %s24, 0
      %p110 = por %p108, %p109
      %p111 = scmp.ne.s32.totalorder %s100, %s103
      %p112 = scmp.eq.s32.totalorder %s29, 1
      %p113 = por %p111, %p112
      %p114 = scmp.ne.s32.totalorder %s103, %s104
      %p115 = scmp.eq.s32.totalorder %s29, 0
      %p116 = por %p114, %p115
      %p117 = scmp.ne.s32.totalorder %s103, %s104
      %p118 = scmp.eq.s32.totalorder %s30, 1
      %p119 = por %p117, %p118
      %p121 = scmp.ne.s32.totalorder %s104, %s120
      %p122 = scmp.eq.s32.totalorder %s30, 0
      %p123 = por %p121, %p122
      %s125 = sadd.s32 %s124, 1
      %p128 = scmp.eq.s32.totalorder %s24, 1
      %p129 = scmp.ne.s32.totalorder %s124, %s126
      %p130 = scmp.eq.s32.totalorder %s24, 0
      %p131 = por %p129, %p130
      %p132 = scmp.ne.s32.totalorder %s124, %s126
      %p133 = scmp.eq.s32.totalorder %s29, 1
      %p134 = por %p132, %p133
      %p135 = scmp.ne.s32.totalorder %s126, %s127
      %p136 = scmp.eq.s32.totalorder %s29, 0
      %p137 = por %p135, %p136
      %p138 = scmp.ne.s32.totalorder %s126, %s127
      %p139 = scmp.eq.s32.totalorder %s30, 1
      %p140 = por %p138, %p139
      %p142 = scmp.ne.s32.totalorder %s127, %s141
      %p143 = scmp.eq.s32.totalorder %s30, 0
      %p144 = por %p142, %p143
      %s146 = sadd.s32 %s145, 1
      %p149 = scmp.eq.s32.totalorder %s24, 1
      %p150 = scmp.ne.s32.totalorder %s145, %s147
      %p151 = scmp.eq.s32.totalorder %s24, 0
      %p152 = por %p150, %p151
      %p153 = scmp.ne.s32.totalorder %s145, %s147
      %p154 = scmp.eq.s32.totalorder %s29, 1
      %p155 = por %p153, %p154
      %p156 = scmp.ne.s32.totalorder %s147, %s148
      %p157 = scmp.eq.s32.totalorder %s29, 0
      %p158 = por %p156, %p157
      %p159 = scmp.ne.s32.totalorder %s147, %s148
      %p160 = scmp.eq.s32.totalorder %s30, 1
      %p161 = por %p159, %p160
      %p163 = scmp.ne.s32.totalorder %s148, %s162
      %p164 = scmp.eq.s32.totalorder %s30, 0
      %p165 = por %p163, %p164
      %s167 = sadd.s32 %s166, 1
      %p170 = scmp.eq.s32.totalorder %s24, 1
      %p171 = scmp.ne.s32.totalorder %s166, %s168
      %p172 = scmp.eq.s32.totalorder %s24, 0
      %p173 = por %p171, %p172
      %p174 = scmp.ne.s32.totalorder %s166, %s168
      %p175 = scmp.eq.s32.totalorder %s29, 1
      %p176 = por %p174, %p175
      %p177 = scmp.ne.s32.totalorder %s168, %s169
      %p178 = scmp.eq.s32.totalorder %s29, 0
      %p179 = por %p177, %p178
      %p180 = scmp.ne.s32.totalorder %s168, %s169
      %p181 = scmp.eq.s32.totalorder %s30, 1
      %p182 = por %p180, %p181
      %p184 = scmp.ne.s32.totalorder %s169, %s183
      %p185 = scmp.eq.s32.totalorder %s30, 0
      %p186 = por %p184, %p185
      %s188 = sadd.s32 %s187, 1
      %p191 = scmp.eq.s32.totalorder %s24, 1
      %p192 = scmp.ne.s32.totalorder %s187, %s189
      %p193 = scmp.eq.s32.totalorder %s24, 0
      %p194 = por %p192, %p193
      %p195 = scmp.ne.s32.totalorder %s187, %s189
      %p196 = scmp.eq.s32.totalorder %s29, 1
      %p197 = por %p195, %p196
      %p198 = scmp.ne.s32.totalorder %s189, %s190
      %p199 = scmp.eq.s32.totalorder %s29, 0
      %p200 = por %p198, %p199
      %p201 = scmp.ne.s32.totalorder %s189, %s190
      %p202 = scmp.eq.s32.totalorder %s30, 1
      %p203 = por %p201, %p202
      %p205 = scmp.ne.s32.totalorder %s190, %s204
      %p206 = scmp.eq.s32.totalorder %s30, 0
      %p207 = por %p205, %p206
      %s209 = sadd.s32 %s208, 1
      %p212 = scmp.eq.s32.totalorder %s24, 1
      %p213 = scmp.ne.s32.totalorder %s208, %s210
      %p214 = scmp.eq.s32.totalorder %s24, 0
      %p215 = por %p213, %p214
      %p216 = scmp.ne.s32.totalorder %s208, %s210
      %p217 = scmp.eq.s32.totalorder %s29, 1
      %p218 = por %p216, %p217
      %p219 = scmp.ne.s32.totalorder %s210, %s211
      %p220 = scmp.eq.s32.totalorder %s29, 0
      %p221 = por %p219, %p220
      %p222 = scmp.ne.s32.totalorder %s210, %s211
      %p223 = scmp.eq.s32.totalorder %s30, 1
      %p224 = por %p222, %p223
      %p226 = scmp.ne.s32.totalorder %s211, %s225
      %p227 = scmp.eq.s32.totalorder %s30, 0
      %p228 = por %p226, %p227
      %s229 = ssub.s32 %s31, %s43
      %s230 = ssub.s32 %s32, %s39
      %s231 = sor.u32 %s229, %s230
      %p232 = scmp.eq.s32.totalorder %s231, 0
      %s234 = sadd.s32 %s233, 1
      %s235 = scalar_select %p232, %s233, %s234
      %p238 = pneg %p232
      %p239 = scmp.eq.s32.totalorder %s24, 1
      %p240 = por %p238, %p239
      %p241 = scmp.ne.s32.totalorder %s233, %s236
      %p242 = scmp.eq.s32.totalorder %s24, 0
      %p243 = por %p241, %p242
      %p244 = scmp.ne.s32.totalorder %s233, %s236
      %p245 = scmp.eq.s32.totalorder %s29, 1
      %p246 = por %p244, %p245
      %p247 = scmp.ne.s32.totalorder %s236, %s237
      %p248 = scmp.eq.s32.totalorder %s29, 0
      %p249 = por %p247, %p248
      %p250 = scmp.ne.s32.totalorder %s236, %s237
      %p251 = scmp.eq.s32.totalorder %s30, 1
      %p252 = por %p250, %p251
      %p254 = scmp.ne.s32.totalorder %s237, %s253
      %p255 = scmp.eq.s32.totalorder %s30, 0
      %p256 = por %p254, %p255
      %s257 = ssub.s32 %s31, %s43
      %s258 = ssub.s32 %s32, %s39
      %s259 = sor.u32 %s257, %s258
      %p260 = scmp.eq.s32.totalorder %s259, 0
      %s262 = sadd.s32 %s261, 1
      %s263 = scalar_select %p260, %s261, %s262
      %p266 = pneg %p260
      %p267 = scmp.eq.s32.totalorder %s24, 1
      %p268 = por %p266, %p267
      %p269 = scmp.ne.s32.totalorder %s261, %s264
      %p270 = scmp.eq.s32.totalorder %s24, 0
      %p271 = por %p269, %p270
      %p272 = scmp.ne.s32.totalorder %s261, %s264
      %p273 = scmp.eq.s32.totalorder %s29, 1
      %p274 = por %p272, %p273
      %p275 = scmp.ne.s32.totalorder %s264, %s265
      %p276 = scmp.eq.s32.totalorder %s29, 0
      %p277 = por %p275, %p276
      %p278 = scmp.ne.s32.totalorder %s264, %s265
      %p279 = scmp.eq.s32.totalorder %s30, 1
      %p280 = por %p278, %p279
      %p282 = scmp.ne.s32.totalorder %s265, %s281
      %p283 = scmp.eq.s32.totalorder %s30, 0
      %p284 = por %p282, %p283
      %p285 = scmp.le.s32.totalorder 1, %s24
      %p286 = scmp.lt.s32.totalorder %s24, 3
      %p287 = pnand %p285, %p286
      %p288 = pneg %p287
      // Predicated region
      $region9: #{tpu_custom_call.1} parent=5 // pred_check
        _
      $region10: #{tpu_custom_call.1} parent=5 // pred_check_branch
        %290 = sbr.rel (%p287) target = $region12
      $region11: #{tpu_custom_call.1} parent=5 // pred_region
        %s291 = ssub.s32 %s24, 1
        // Predicated region
        $region13: #{tpu_custom_call.1} parent=11 // pred_check
          %p292 = pneg %p137
        $region14: #{tpu_custom_call.1} parent=11 // pred_check_branch
          %294 = sbr.rel (%p292) target = $region16
        $region15: #{tpu_custom_call.1} parent=11 // pred_region
          _
        $region16: #{tpu_custom_call.1} parent=11 // pred_fallthru
          _
        // Predicated region
        $region17: #{tpu_custom_call.1} parent=11 // pred_check
          %p295 = pneg %p158
        $region18: #{tpu_custom_call.1} parent=11 // pred_check_branch
          %297 = sbr.rel (%p295) target = $region20
        $region19: #{tpu_custom_call.1} parent=11 // pred_region
          _
        $region20: #{tpu_custom_call.1} parent=11 // pred_fallthru
          _
        // Predicated region
        $region21: #{tpu_custom_call.1} parent=11 // pred_check
          %p298 = pneg %p179
        $region22: #{tpu_custom_call.1} parent=11 // pred_check_branch
          %300 = sbr.rel (%p298) target = $region24
        $region23: #{tpu_custom_call.1} parent=11 // pred_region
          _
        $region24: #{tpu_custom_call.1} parent=11 // pred_fallthru
          _
        // Predicated region
        $region25: #{tpu_custom_call.1} parent=11 // pred_check
          %p301 = pneg %p200
        $region26: #{tpu_custom_call.1} parent=11 // pred_check_branch
          %303 = sbr.rel (%p301) target = $region28
        $region27: #{tpu_custom_call.1} parent=11 // pred_region
          _
        $region28: #{tpu_custom_call.1} parent=11 // pred_fallthru
          _
        // Predicated region
        $region29: #{tpu_custom_call.1} parent=11 // pred_check
          %p304 = pneg %p221
        $region30: #{tpu_custom_call.1} parent=11 // pred_check_branch
          %306 = sbr.rel (%p304) target = $region32
        $region31: #{tpu_custom_call.1} parent=11 // pred_region
          _
        $region32: #{tpu_custom_call.1} parent=11 // pred_fallthru
          _
      $region12: #{tpu_custom_call.1} parent=5 // pred_fallthru
        _
      %p307 = scmp.lt.s32.totalorder %s24, 2
      // Predicated region
      $region33: #{tpu_custom_call.1} parent=5 // pred_check
        %p308 = pneg %p307
      $region34: #{tpu_custom_call.1} parent=5 // pred_check_branch
        %310 = sbr.rel (%p308) target = $region36
      $region35: #{tpu_custom_call.1} parent=5 // pred_region
        // Predicated region
        $region37: #{tpu_custom_call.1} parent=35 // pred_check
          %p311 = pneg %p58
        $region38: #{tpu_custom_call.1} parent=35 // pred_check_branch
          %313 = sbr.rel (%p311) target = $region40
        $region39: #{tpu_custom_call.1} parent=35 // pred_region
          %s314 = smul.u32 2, %s32
          %p315 = scmp.lt.s32.totalorder %s31, 1
          %s316 = scalar_select %p315, %s31, 1
          %p317 = scmp.lt.s32.totalorder %s314, 1
          %s318 = scalar_select %p317, %s314, 1
          %s319 = smul.addr %s316, 2
          %s320 = sadd.s32 %s318, %s319
          %s321 = smul.addr %s320, 8
          %s322 = scalar_lea.vmem %s0, %s321
          %s323 = smul.u32 2, %s32
        $region40: #{tpu_custom_call.1} parent=35 // pred_fallthru
          _
        // Predicated region
        $region41: #{tpu_custom_call.1} parent=35 // pred_check
          %p324 = pneg %p84
        $region42: #{tpu_custom_call.1} parent=35 // pred_check_branch
          %326 = sbr.rel (%p324) target = $region44
        $region43: #{tpu_custom_call.1} parent=35 // pred_region
          %p327 = scmp.lt.s32.totalorder %s31, 1
          %s328 = scalar_select %p327, %s31, 1
          %s329 = smul.addr %s328, 4
          %s330 = smul.addr %s329, 4
          %s331 = scalar_lea.vmem %s1, %s330
        $region44: #{tpu_custom_call.1} parent=35 // pred_fallthru
          _
        // Predicated region
        $region45: #{tpu_custom_call.1} parent=35 // pred_check
          %p332 = pneg %p110
        $region46: #{tpu_custom_call.1} parent=35 // pred_check_branch
          %334 = sbr.rel (%p332) target = $region48
        $region47: #{tpu_custom_call.1} parent=35 // pred_region
          %p335 = scmp.lt.s32.totalorder %s31, 1
          %s336 = scalar_select %p335, %s31, 1
          %s337 = smul.addr %s336, 12
          %s338 = smul.addr %s337, 4
          %s339 = scalar_lea.vmem %s2, %s338
        $region48: #{tpu_custom_call.1} parent=35 // pred_fallthru
          _
      $region36: #{tpu_custom_call.1} parent=5 // pred_fallthru
        _
      %p340 = scmp.le.s32.totalorder 1, %s24
      %p341 = scmp.lt.s32.totalorder %s24, 3
      %p342 = pnand %p340, %p341
      %p343 = pneg %p342
      // Predicated region
      $region49: #{tpu_custom_call.1} parent=5 // pred_check
        _
      $region50: #{tpu_custom_call.1} parent=5 // pred_check_branch
        %345 = sbr.rel (%p342) target = $region52
      $region51: #{tpu_custom_call.1} parent=5 // pred_region
        %s346 = ssub.s32 %s24, 1
        %s347 = smul.u32 2, %s34
        %p348 = scmp.lt.s32.totalorder %s33, 1
        %s349 = scalar_select %p348, %s33, 1
        %p350 = scmp.lt.s32.totalorder %s347, 1
        %s351 = scalar_select %p350, %s347, 1
        %s352 = smul.addr %s349, 2
        %s353 = sadd.s32 %s351, %s352
        %s354 = smul.addr %s353, 8
        %s355 = scalar_lea.vmem %s0, %s354
        %p356 = pneg %p64
        %p357 = pneg %p61
        %p358 = scmp.lt.s32.totalorder %s33, 1
        %s359 = scalar_select %p358, %s33, 1
        %s360 = smul.addr %s359, 4
        %s361 = smul.addr %s360, 4
        %s362 = scalar_lea.vmem %s1, %s361
        %p363 = pneg %p90
        %p364 = pneg %p87
        %p365 = scmp.lt.s32.totalorder %s33, 1
        %s366 = scalar_select %p365, %s33, 1
        %s367 = smul.addr %s366, 12
        %s368 = smul.addr %s367, 4
        %s369 = scalar_lea.vmem %s2, %s368
        %p370 = pneg %p116
        %p371 = pneg %p113
        %p372 = pneg %p137
        %p373 = pneg %p134
        %p374 = pneg %p158
        %p375 = pneg %p155
        %p376 = pneg %p179
        %p377 = pneg %p176
        %p378 = pneg %p200
        %p379 = pneg %p197
        %p380 = pneg %p221
        %p381 = pneg %p218
        %p382 = pneg %p249
        %p383 = pneg %p246
        %s384 = sand.u32 %s236, 1
        %s385 = scalar_lea.sflag [#allocation4], %s384
        %s386 = sand.u32 %s236, 1
        %s387 = smul.addr %s386, 32
        %s388 = scalar_lea.vmem [#allocation3], %s387
        %p389 = pneg %p277
        %p390 = pneg %p274
        %s391 = sand.u32 %s264, 1
        %s392 = scalar_lea.sflag [#allocation6], %s391
        %s393 = sand.u32 %s264, 1
        %s394 = smul.addr %s393, 2
        %s395 = scalar_lea.vmem [#allocation5], %s394
        %s396 = smul.u32 2, %s34
        %p397 = scmp.lt.s32.totalorder %s33, 1
        %s398 = scalar_select %p397, %s33, 1
        %p399 = scmp.lt.s32.totalorder %s396, 1
        %s400 = scalar_select %p399, %s396, 1
        %s401 = smul.addr %s398, 2
        %s402 = sadd.s32 %s400, %s401
        %s403 = smul.addr %s402, 8
        %s404 = scalar_lea.vmem %s0, %s403
        %s405 = smul.u32 2, %s34
        %p406 = scmp.lt.s32.totalorder %s33, 1
        %s407 = scalar_select %p406, %s33, 1
        %s408 = smul.addr %s407, 4
        %s409 = smul.addr %s408, 4
        %s410 = scalar_lea.vmem %s1, %s409
        %p411 = scmp.lt.s32.totalorder %s33, 1
        %s412 = scalar_select %p411, %s33, 1
        %s413 = smul.addr %s412, 12
        %s414 = smul.addr %s413, 4
        %s415 = scalar_lea.vmem %s2, %s414
        %s416 = smul.u32 2, %s34
        %s417 = smul.u32 2, %s34
        %v419 = vld [vmem:[%s404] sm:$0xff]
        %v420 = vld [vmem:[%s404 + $0x8] sm:$0xff]
        %v421 = vpack.c.bf16 %v419, %v419
        %v422 = vpack.c.bf16 %v420, %v420
        %v423 = vld [vmem:[%s410] sm:$0xf]
        %v424 = vld [vmem:[%s410 + $0x4] sm:$0xf]
        %v425 = vld [vmem:[%s410 + $0x8] sm:$0xf]
        %v426 = vld [vmem:[%s410 + $0xc] sm:$0xf]
        %v427 = vld [vmem:[%s3] sm:$0xff]
        %v428 = vld [vmem:[%s3 + $0x8] sm:$0xff]
        %v429 = vld [vmem:[%s3 + $0x10] sm:$0xff]
        %v430 = vld [vmem:[%s3 + $0x18] sm:$0xff]
        %432 = vset.pattern.permute.xlu0 0
        %433 = vperm.xlu0 %432, %v427
        %v434 = vpop.permute.xlu0 %433
        %437 = vset.pattern.permute.xlu0 0
        %438 = vperm.xlu0 %437, %v428
        %v439 = vpop.permute.xlu0 %438
        %442 = vset.pattern.permute.xlu0 0
        %443 = vperm.xlu0 %442, %v429
        %v444 = vpop.permute.xlu0 %443
        %447 = vset.pattern.permute.xlu0 0
        %448 = vperm.xlu0 %447, %v430
        %v449 = vpop.permute.xlu0 %448
        %v455 = vunpack.c.l.b16 %v423
        %v456 = vunpack.c.l.b16 %v424
        %v457 = vunpack.c.l.b16 %v425
        %v458 = vunpack.c.l.b16 %v426
        %v459 = vpack.c.b16 %v456, %v455
        %v460 = vpack.c.b16 %v458, %v457
        %vm461 = vcmask 64512
        %v463 = vsel %vm461, %v459, 0
        %v466 = vsel %vm461, %v460, 0
        %vm468 = vcmask 1043456
        %v470 = vsel %vm468, %v421, 0
        %v473 = vsel %vm468, %v422, 0
        %475 = vmatprep.subr.bf16.mxu0 %v473
        %476 = vmatpush1.bf16.msra.mxu0 %v470
        %477 = vmatprep.subr.bf16.mxu0 0
        %478 = vmatpush1.bf16.msra.mxu0 0
        %479 = vmatprep.subr.bf16.mxu0 0
        %480 = vmatpush1.bf16.msra.mxu0 0
        %481 = vmatprep.subr.bf16.mxu0 0
        %482 = vmatpush1.bf16.msra.mxu0 0
        %483 = vmatprep.subr.bf16.mxu0 0
        %484 = vmatpush1.bf16.msra.mxu0 0
        %485 = vmatprep.subr.bf16.mxu0 0
        %486 = vmatpush1.bf16.msra.mxu0 0
        %487 = vmatprep.subr.bf16.mxu0 0
        %488 = vmatpush1.bf16.msra.mxu0 0
        %489 = vmatprep.subr.bf16.mxu0 0
        %490 = vmatpush1.bf16.msra.mxu0 0
        %491 = vmatprep.subr.bf16.mxu0 0
        %492 = vmatpush1.bf16.msra.mxu0 0
        %493 = vmatprep.subr.bf16.mxu0 0
        %494 = vmatpush1.bf16.msra.mxu0 0
        %495 = vmatprep.subr.bf16.mxu0 0
        %496 = vmatpush1.bf16.msra.mxu0 0
        %497 = vmatprep.subr.bf16.mxu0 0
        %498 = vmatpush1.bf16.msra.mxu0 0
        %499 = vmatprep.subr.bf16.mxu0 0
        %500 = vmatpush1.bf16.msra.mxu0 0
        %501 = vmatprep.subr.bf16.mxu0 0
        %502 = vmatpush1.bf16.msra.mxu0 0
        %503 = vmatprep.subr.bf16.mxu0 0
        %504 = vmatpush1.bf16.msra.mxu0 0
        %505 = vmatprep.subr.bf16.mxu0 0
        %506 = vmatpush1.bf16.msra.mxu0 0
        %507 = vmatprep.mubr.bf16.mxu0 0
        %508 = vmatmul.mubr.bf16.gmra.mrb[0].mxu0 %v463
        %v509 = vpop.f32.mrb[0].mxu0
        %v510 = vadd.f32 %v434, %v509
        %v511 = vpop.f32.mrb[0].mxu0
        %v512 = vadd.f32 %v434, %v511
        %v513 = vpop.f32.mrb[0].mxu0
        %v514 = vadd.f32 %v439, %v513
        %v515 = vpop.f32.mrb[0].mxu0
        %v516 = vadd.f32 %v439, %v515
        %517 = vmatprep.mubr.bf16.mxu0 0
        %518 = vmatmul.mubr.bf16.gmra.mrb[0].mxu0 %v466
        %v519 = vpop.f32.mrb[0].mxu0
        %v520 = vadd.f32 %v444, %v519
        %v521 = vpop.f32.mrb[0].mxu0
        %v522 = vadd.f32 %v444, %v521
        %v523 = vpop.f32.mrb[0].mxu0
        %v524 = vadd.f32 %v449, %v523
        %v525 = vpop.f32.mrb[0].mxu0
        %v526 = vadd.f32 %v449, %v525
        %527 = vdwg.mxu0
        %v528 = vmul.f32 %v510, 0.2
        %v529 = vmul.f32 %v512, 0.2
        %v530 = vmul.f32 %v514, 0.2
        %v531 = vmul.f32 %v516, 0.2
        %v532 = vmul.f32 %v520, 0.2
        %v533 = vmul.f32 %v522, 0.2
        %v534 = vmul.f32 %v524, 0.2
        %v535 = vmul.f32 %v526, 0.2
        %v536 = vmax.f32 %v510, %v528
        %v537 = vmax.f32 %v512, %v529
        %v538 = vmax.f32 %v514, %v530
        %v539 = vmax.f32 %v516, %v531
        %v540 = vmax.f32 %v520, %v532
        %v541 = vmax.f32 %v522, %v533
        %v542 = vmax.f32 %v524, %v534
        %v543 = vmax.f32 %v526, %v535
        %v544 = vpack.c.bf16 %v538, %v536
        %v545 = vpack.c.bf16 %v539, %v537
        %v546 = vpack.c.bf16 %v542, %v540
        %v547 = vpack.c.bf16 %v543, %v541
        %v548 = vld [vmem:[%s415] sm:$0xf]
        %v549 = vld [vmem:[%s415 + $0x4] sm:$0xf]
        %v550 = vld [vmem:[%s415 + $0x8] sm:$0xf]
        %v551 = vld [vmem:[%s415 + $0xc] sm:$0xf]
        %s552 = scalar_lea.vmem %s3, 32
        %v553 = vld [vmem:[%s552] sm:$0xff]
        %v554 = vld [vmem:[%s552 + $0x8] sm:$0xff]
        %v555 = vld [vmem:[%s552 + $0x10] sm:$0xff]
        %v556 = vld [vmem:[%s552 + $0x18] sm:$0xff]
        %558 = vset.pattern.permute.xlu0 0
        %559 = vperm.xlu0 %558, %v553
        %v560 = vpop.permute.xlu0 %559
        %563 = vset.pattern.permute.xlu0 0
        %564 = vperm.xlu0 %563, %v554
        %v565 = vpop.permute.xlu0 %564
        %568 = vset.pattern.permute.xlu0 0
        %569 = vperm.xlu0 %568, %v555
        %v570 = vpop.permute.xlu0 %569
        %573 = vset.pattern.permute.xlu0 0
        %574 = vperm.xlu0 %573, %v556
        %v575 = vpop.permute.xlu0 %574
        %v581 = vunpack.c.l.b16 %v548
        %v582 = vunpack.c.l.b16 %v549
        %v583 = vunpack.c.l.b16 %v550
        %v584 = vunpack.c.l.b16 %v551
        %v585 = vpack.c.b16 %v582, %v581
        %v586 = vpack.c.b16 %v584, %v583
        %vm587 = vcmask 261120
        %v589 = vsel %vm587, %v585, 0
        %v592 = vsel %vm587, %v586, 0
        %594 = vmatprep.subr.bf16.mxu0 %v545
        %595 = vmatpush1.bf16.msra.mxu0 %v544
        %596 = vmatprep.subr.bf16.mxu0 %v547
        %597 = vmatpush1.bf16.msra.mxu0 %v546
        %598 = vmatprep.subr.bf16.mxu0 0
        %599 = vmatpush1.bf16.msra.mxu0 0
        %600 = vmatprep.subr.bf16.mxu0 0
        %601 = vmatpush1.bf16.msra.mxu0 0
        %602 = vmatprep.subr.bf16.mxu0 0
        %603 = vmatpush1.bf16.msra.mxu0 0
        %604 = vmatprep.subr.bf16.mxu0 0
        %605 = vmatpush1.bf16.msra.mxu0 0
        %606 = vmatprep.subr.bf16.mxu0 0
        %607 = vmatpush1.bf16.msra.mxu0 0
        %608 = vmatprep.subr.bf16.mxu0 0
        %609 = vmatpush1.bf16.msra.mxu0 0
        %610 = vmatprep.subr.bf16.mxu0 0
        %611 = vmatpush1.bf16.msra.mxu0 0
        %612 = vmatprep.subr.bf16.mxu0 0
        %613 = vmatpush1.bf16.msra.mxu0 0
        %614 = vmatprep.subr.bf16.mxu0 0
        %615 = vmatpush1.bf16.msra.mxu0 0
        %616 = vmatprep.subr.bf16.mxu0 0
        %617 = vmatpush1.bf16.msra.mxu0 0
        %618 = vmatprep.subr.bf16.mxu0 0
        %619 = vmatpush1.bf16.msra.mxu0 0
        %620 = vmatprep.subr.bf16.mxu0 0
        %621 = vmatpush1.bf16.msra.mxu0 0
        %622 = vmatprep.subr.bf16.mxu0 0
        %623 = vmatpush1.bf16.msra.mxu0 0
        %624 = vmatprep.subr.bf16.mxu0 0
        %625 = vmatpush1.bf16.msra.mxu0 0
        %626 = vmatprep.mubr.bf16.mxu0 0
        %627 = vmatmul.mubr.bf16.gmra.mrb[0].mxu0 %v589
        %v628 = vpop.f32.mrb[0].mxu0
        %v629 = vadd.f32 %v560, %v628
        %v630 = vpop.f32.mrb[0].mxu0
        %v631 = vadd.f32 %v560, %v630
        %v632 = vpop.f32.mrb[0].mxu0
        %v633 = vadd.f32 %v565, %v632
        %v634 = vpop.f32.mrb[0].mxu0
        %v635 = vadd.f32 %v565, %v634
        %636 = vmatprep.mubr.bf16.mxu0 0
        %637 = vmatmul.mubr.bf16.gmra.mrb[0].mxu0 %v592
        %v638 = vpop.f32.mrb[0].mxu0
        %v639 = vadd.f32 %v570, %v638
        %v640 = vpop.f32.mrb[0].mxu0
        %v641 = vadd.f32 %v570, %v640
        %v642 = vpop.f32.mrb[0].mxu0
        %v643 = vadd.f32 %v575, %v642
        %v644 = vpop.f32.mrb[0].mxu0
        %v645 = vadd.f32 %v575, %v644
        %646 = vdwg.mxu0
        %v647 = vmul.f32 %v629, 0.2
        %v648 = vmul.f32 %v631, 0.2
        %v649 = vmul.f32 %v633, 0.2
        %v650 = vmul.f32 %v635, 0.2
        %v651 = vmul.f32 %v639, 0.2
        %v652 = vmul.f32 %v641, 0.2
        %v653 = vmul.f32 %v643, 0.2
        %v654 = vmul.f32 %v645, 0.2
        %v655 = vmax.f32 %v629, %v647
        %v656 = vmax.f32 %v631, %v648
        %v657 = vmax.f32 %v633, %v649
        %v658 = vmax.f32 %v635, %v650
        %v659 = vmax.f32 %v639, %v651
        %v660 = vmax.f32 %v641, %v652
        %v661 = vmax.f32 %v643, %v653
        %v662 = vmax.f32 %v645, %v654
        %v663 = vpack.c.bf16 %v657, %v655
        %v664 = vpack.c.bf16 %v658, %v656
        %v665 = vpack.c.bf16 %v661, %v659
        %v666 = vpack.c.bf16 %v662, %v660
        %s667 = scalar_lea.vmem %s415, 16
        %v668 = vld [vmem:[%s667] sm:$0xf]
        %v669 = vld [vmem:[%s667 + $0x4] sm:$0xf]
        %v670 = vld [vmem:[%s667 + $0x8] sm:$0xf]
        %v671 = vld [vmem:[%s667 + $0xc] sm:$0xf]
        %s672 = scalar_lea.vmem %s3, 64
        %v673 = vld [vmem:[%s672] sm:$0xff]
        %v674 = vld [vmem:[%s672 + $0x8] sm:$0xff]
        %v675 = vld [vmem:[%s672 + $0x10] sm:$0xff]
        %v676 = vld [vmem:[%s672 + $0x18] sm:$0xff]
        %678 = vset.pattern.permute.xlu0 0
        %679 = vperm.xlu0 %678, %v673
        %v680 = vpop.permute.xlu0 %679
        %683 = vset.pattern.permute.xlu0 0
        %684 = vperm.xlu0 %683, %v674
        %v685 = vpop.permute.xlu0 %684
        %688 = vset.pattern.permute.xlu0 0
        %689 = vperm.xlu0 %688, %v675
        %v690 = vpop.permute.xlu0 %689
        %693 = vset.pattern.permute.xlu0 0
        %694 = vperm.xlu0 %693, %v676
        %v695 = vpop.permute.xlu0 %694
        %v701 = vunpack.c.l.b16 %v668
        %v702 = vunpack.c.l.b16 %v669
        %v703 = vunpack.c.l.b16 %v670
        %v704 = vunpack.c.l.b16 %v671
        %v705 = vpack.c.b16 %v702, %v701
        %v706 = vpack.c.b16 %v704, %v703
        %v708 = vsel %vm587, %v705, 0
        %v711 = vsel %vm587, %v706, 0
        %713 = vmatprep.subr.bf16.mxu0 %v664
        %714 = vmatpush1.bf16.msra.mxu0 %v663
        %715 = vmatprep.subr.bf16.mxu0 %v666
        %716 = vmatpush1.bf16.msra.mxu0 %v665
        %717 = vmatprep.subr.bf16.mxu0 0
        %718 = vmatpush1.bf16.msra.mxu0 0
        %719 = vmatprep.subr.bf16.mxu0 0
        %720 = vmatpush1.bf16.msra.mxu0 0
        %721 = vmatprep.subr.bf16.mxu0 0
        %722 = vmatpush1.bf16.msra.mxu0 0
        %723 = vmatprep.subr.bf16.mxu0 0
        %724 = vmatpush1.bf16.msra.mxu0 0
        %725 = vmatprep.subr.bf16.mxu0 0
        %726 = vmatpush1.bf16.msra.mxu0 0
        %727 = vmatprep.subr.bf16.mxu0 0
        %728 = vmatpush1.bf16.msra.mxu0 0
        %729 = vmatprep.subr.bf16.mxu0 0
        %730 = vmatpush1.bf16.msra.mxu0 0
        %731 = vmatprep.subr.bf16.mxu0 0
        %732 = vmatpush1.bf16.msra.mxu0 0
        %733 = vmatprep.subr.bf16.mxu0 0
        %734 = vmatpush1.bf16.msra.mxu0 0
        %735 = vmatprep.subr.bf16.mxu0 0
        %736 = vmatpush1.bf16.msra.mxu0 0
        %737 = vmatprep.subr.bf16.mxu0 0
        %738 = vmatpush1.bf16.msra.mxu0 0
        %739 = vmatprep.subr.bf16.mxu0 0
        %740 = vmatpush1.bf16.msra.mxu0 0
        %741 = vmatprep.subr.bf16.mxu0 0
        %742 = vmatpush1.bf16.msra.mxu0 0
        %743 = vmatprep.subr.bf16.mxu0 0
        %744 = vmatpush1.bf16.msra.mxu0 0
        %745 = vmatprep.mubr.bf16.mxu0 0
        %746 = vmatmul.mubr.bf16.gmra.mrb[0].mxu0 %v708
        %v747 = vpop.f32.mrb[0].mxu0
        %v748 = vadd.f32 %v680, %v747
        %v749 = vpop.f32.mrb[0].mxu0
        %v750 = vadd.f32 %v680, %v749
        %v751 = vpop.f32.mrb[0].mxu0
        %v752 = vadd.f32 %v685, %v751
        %v753 = vpop.f32.mrb[0].mxu0
        %v754 = vadd.f32 %v685, %v753
        %755 = vmatprep.mubr.bf16.mxu0 0
        %756 = vmatmul.mubr.bf16.gmra.mrb[0].mxu0 %v711
        %v757 = vpop.f32.mrb[0].mxu0
        %v758 = vadd.f32 %v690, %v757
        %v759 = vpop.f32.mrb[0].mxu0
        %v760 = vadd.f32 %v690, %v759
        %v761 = vpop.f32.mrb[0].mxu0
        %v762 = vadd.f32 %v695, %v761
        %v763 = vpop.f32.mrb[0].mxu0
        %v764 = vadd.f32 %v695, %v763
        %765 = vdwg.mxu0
        %v766 = vmul.f32 %v748, 0.2
        %v767 = vmul.f32 %v750, 0.2
        %v768 = vmul.f32 %v752, 0.2
        %v769 = vmul.f32 %v754, 0.2
        %v770 = vmul.f32 %v758, 0.2
        %v771 = vmul.f32 %v760, 0.2
        %v772 = vmul.f32 %v762, 0.2
        %v773 = vmul.f32 %v764, 0.2
        %v774 = vmax.f32 %v748, %v766
        %v775 = vmax.f32 %v750, %v767
        %v776 = vmax.f32 %v752, %v768
        %v777 = vmax.f32 %v754, %v769
        %v778 = vmax.f32 %v758, %v770
        %v779 = vmax.f32 %v760, %v771
        %v780 = vmax.f32 %v762, %v772
        %v781 = vmax.f32 %v764, %v773
        %v782 = vpack.c.bf16 %v776, %v774
        %v783 = vpack.c.bf16 %v777, %v775
        %v784 = vpack.c.bf16 %v780, %v778
        %v785 = vpack.c.bf16 %v781, %v779
        %v786 = vld [vmem:[%s6] sm:$0x1]
        %v787 = vld [vmem:[#allocation2] sm:$0x1]
        %789 = vset.pattern.permute.xlu0 0
        %790 = vperm.xlu0 %789, %v787
        %v791 = vpop.permute.xlu0 %790
        %v793 = vlaneseq
        %v794 = vshrl.u32 %v793, 7
        %v795 = vsub.s32 0, %v794
        %v796 = vrot.slane %v791, %v795
        %v798 = vsel %vm587, %v786, 0
        %800 = vmatprep.subr.bf16.mxu0 %v783
        %801 = vmatpush1.bf16.msra.mxu0 %v782
        %802 = vmatprep.subr.bf16.mxu0 %v785
        %803 = vmatpush1.bf16.msra.mxu0 %v784
        %804 = vmatprep.subr.bf16.mxu0 0
        %805 = vmatpush1.bf16.msra.mxu0 0
        %806 = vmatprep.subr.bf16.mxu0 0
        %807 = vmatpush1.bf16.msra.mxu0 0
        %808 = vmatprep.subr.bf16.mxu0 0
        %809 = vmatpush1.bf16.msra.mxu0 0
        %810 = vmatprep.subr.bf16.mxu0 0
        %811 = vmatpush1.bf16.msra.mxu0 0
        %812 = vmatprep.subr.bf16.mxu0 0
        %813 = vmatpush1.bf16.msra.mxu0 0
        %814 = vmatprep.subr.bf16.mxu0 0
        %815 = vmatpush1.bf16.msra.mxu0 0
        %816 = vmatprep.subr.bf16.mxu0 0
        %817 = vmatpush1.bf16.msra.mxu0 0
        %818 = vmatprep.subr.bf16.mxu0 0
        %819 = vmatpush1.bf16.msra.mxu0 0
        %820 = vmatprep.subr.bf16.mxu0 0
        %821 = vmatpush1.bf16.msra.mxu0 0
        %822 = vmatprep.subr.bf16.mxu0 0
        %823 = vmatpush1.bf16.msra.mxu0 0
        %824 = vmatprep.subr.bf16.mxu0 0
        %825 = vmatpush1.bf16.msra.mxu0 0
        %826 = vmatprep.subr.bf16.mxu0 0
        %827 = vmatpush1.bf16.msra.mxu0 0
        %828 = vmatprep.subr.bf16.mxu0 0
        %829 = vmatpush1.bf16.msra.mxu0 0
        %830 = vmatprep.subr.bf16.mxu0 0
        %831 = vmatpush1.bf16.msra.mxu0 0
        %832 = vmatprep.mubr.bf16.mxu0 0
        %833 = vmatmul.mubr.bf16.gmra.mrb[0].mxu0 %v798
        %v834 = vpop.f32.mrb[0].mxu0
        %v835 = vadd.f32 %v796, %v834
        %v836 = vpop.f32.mrb[0].mxu0
        %v837 = vadd.f32 %v796, %v836
        %v838 = vpop.f32.mrb[0].mxu0
        %v839 = vpop.f32.mrb[0].mxu0
        %840 = vdwg.mxu0
        %v843 = vcombine.low %v835, %v837
        %v845 = vunpack.c.l.s4 1966171168
        %v846 = vunpack.c.0.s8 %v845
        %v847 = vlaneseq
        %v848 = vshrl.u32 %v847, 7
        %v849 = vsub.s32 %v846, %v848
        %v850 = vrot.slane %v843, %v849
        %v852 = vunpack.c.l.s4 1966171168
        %v853 = vunpack.c.0.s8 %v852
        %v854 = vlaneseq
        %v855 = vshrl.u32 %v854, 7
        %v856 = vsub.s32 %v853, %v855
        %v857 = vrot.slane %v850, %v856
        %v859 = vlaneseq
        %vm860 = vcmp.ge.s32.totalorder %v859, 0
        %vm861 = vcmp.lt.s32.totalorder %v859, 256
        %vm862 = vmand %vm860, %vm861
        %863 = vst.msk [vmem:[%s395] sm:$0x3] %vm862, %v857
        %s864 = scalar_lea.vmem %s415, 32
        %v865 = vld [vmem:[%s864] sm:$0xf]
        %v866 = vld [vmem:[%s864 + $0x4] sm:$0xf]
        %v867 = vld [vmem:[%s864 + $0x8] sm:$0xf]
        %v868 = vld [vmem:[%s864 + $0xc] sm:$0xf]
        %s869 = scalar_lea.vmem %s3, 96
        %v870 = vld [vmem:[%s869] sm:$0xff]
        %v871 = vld [vmem:[%s869 + $0x8] sm:$0xff]
        %v872 = vld [vmem:[%s869 + $0x10] sm:$0xff]
        %v873 = vld [vmem:[%s869 + $0x18] sm:$0xff]
        %875 = vset.pattern.permute.xlu0 0
        %876 = vperm.xlu0 %875, %v870
        %v877 = vpop.permute.xlu0 %876
        %880 = vset.pattern.permute.xlu0 0
        %881 = vperm.xlu0 %880, %v871
        %v882 = vpop.permute.xlu0 %881
        %885 = vset.pattern.permute.xlu0 0
        %886 = vperm.xlu0 %885, %v872
        %v887 = vpop.permute.xlu0 %886
        %890 = vset.pattern.permute.xlu0 0
        %891 = vperm.xlu0 %890, %v873
        %v892 = vpop.permute.xlu0 %891
        %v898 = vunpack.c.l.b16 %v865
        %v899 = vunpack.c.l.b16 %v866
        %v900 = vunpack.c.l.b16 %v867
        %v901 = vunpack.c.l.b16 %v868
        %v902 = vpack.c.b16 %v899, %v898
        %v903 = vpack.c.b16 %v901, %v900
        %v905 = vsel %vm587, %v902, 0
        %v908 = vsel %vm587, %v903, 0
        %910 = vmatprep.subr.bf16.mxu0 %v783
        %911 = vmatpush1.bf16.msra.mxu0 %v782
        %912 = vmatprep.subr.bf16.mxu0 %v785
        %913 = vmatpush1.bf16.msra.mxu0 %v784
        %914 = vmatprep.subr.bf16.mxu0 0
        %915 = vmatpush1.bf16.msra.mxu0 0
        %916 = vmatprep.subr.bf16.mxu0 0
        %917 = vmatpush1.bf16.msra.mxu0 0
        %918 = vmatprep.subr.bf16.mxu0 0
        %919 = vmatpush1.bf16.msra.mxu0 0
        %920 = vmatprep.subr.bf16.mxu0 0
        %921 = vmatpush1.bf16.msra.mxu0 0
        %922 = vmatprep.subr.bf16.mxu0 0
        %923 = vmatpush1.bf16.msra.mxu0 0
        %924 = vmatprep.subr.bf16.mxu0 0
        %925 = vmatpush1.bf16.msra.mxu0 0
        %926 = vmatprep.subr.bf16.mxu0 0
        %927 = vmatpush1.bf16.msra.mxu0 0
        %928 = vmatprep.subr.bf16.mxu0 0
        %929 = vmatpush1.bf16.msra.mxu0 0
        %930 = vmatprep.subr.bf16.mxu0 0
        %931 = vmatpush1.bf16.msra.mxu0 0
        %932 = vmatprep.subr.bf16.mxu0 0
        %933 = vmatpush1.bf16.msra.mxu0 0
        %934 = vmatprep.subr.bf16.mxu0 0
        %935 = vmatpush1.bf16.msra.mxu0 0
        %936 = vmatprep.subr.bf16.mxu0 0
        %937 = vmatpush1.bf16.msra.mxu0 0
        %938 = vmatprep.subr.bf16.mxu0 0
        %939 = vmatpush1.bf16.msra.mxu0 0
        %940 = vmatprep.subr.bf16.mxu0 0
        %941 = vmatpush1.bf16.msra.mxu0 0
        %942 = vmatprep.mubr.bf16.mxu0 0
        %943 = vmatmul.mubr.bf16.gmra.mrb[0].mxu0 %v905
        %v944 = vpop.f32.mrb[0].mxu0
        %v945 = vadd.f32 %v877, %v944
        %v946 = vpop.f32.mrb[0].mxu0
        %v947 = vadd.f32 %v877, %v946
        %v948 = vpop.f32.mrb[0].mxu0
        %v949 = vadd.f32 %v882, %v948
        %v950 = vpop.f32.mrb[0].mxu0
        %v951 = vadd.f32 %v882, %v950
        %952 = vmatprep.mubr.bf16.mxu0 0
        %953 = vmatmul.mubr.bf16.gmra.mrb[0].mxu0 %v908
        %v954 = vpop.f32.mrb[0].mxu0
        %v955 = vadd.f32 %v887, %v954
        %v956 = vpop.f32.mrb[0].mxu0
        %v957 = vadd.f32 %v887, %v956
        %v958 = vpop.f32.mrb[0].mxu0
        %v959 = vadd.f32 %v892, %v958
        %v960 = vpop.f32.mrb[0].mxu0
        %v961 = vadd.f32 %v892, %v960
        %962 = vdwg.mxu0
        %v963 = vmul.f32 %v945, 0.2
        %v964 = vmul.f32 %v947, 0.2
        %v965 = vmul.f32 %v949, 0.2
        %v966 = vmul.f32 %v951, 0.2
        %v967 = vmul.f32 %v955, 0.2
        %v968 = vmul.f32 %v957, 0.2
        %v969 = vmul.f32 %v959, 0.2
        %v970 = vmul.f32 %v961, 0.2
        %v971 = vmax.f32 %v945, %v963
        %v972 = vmax.f32 %v947, %v964
        %v973 = vmax.f32 %v949, %v965
        %v974 = vmax.f32 %v951, %v966
        %v975 = vmax.f32 %v955, %v967
        %v976 = vmax.f32 %v957, %v968
        %v977 = vmax.f32 %v959, %v969
        %v978 = vmax.f32 %v961, %v970
        %v979 = vpack.c.bf16 %v973, %v971
        %v980 = vpack.c.bf16 %v974, %v972
        %v981 = vpack.c.bf16 %v977, %v975
        %v982 = vpack.c.bf16 %v978, %v976
        %v983 = vld [vmem:[%s4] sm:$0xf]
        %v984 = vld [vmem:[%s4 + $0x4] sm:$0xf]
        %v985 = vld [vmem:[%s5] sm:$0xff]
        %v986 = vld [vmem:[%s5 + $0x8] sm:$0xff]
        %988 = vset.pattern.permute.xlu0 0
        %989 = vperm.xlu0 %988, %v985
        %v990 = vpop.permute.xlu0 %989
        %993 = vset.pattern.permute.xlu0 0
        %994 = vperm.xlu0 %993, %v986
        %v995 = vpop.permute.xlu0 %994
        %v999 = vunpack.c.l.b16 %v983
        %v1000 = vunpack.c.l.b16 %v984
        %v1001 = vpack.c.b16 %v1000, %v999
        %v1003 = vsel %vm587, %v1001, 0
        %1005 = vmatprep.subr.bf16.mxu0 %v980
        %1006 = vmatpush1.bf16.msra.mxu0 %v979
        %1007 = vmatprep.subr.bf16.mxu0 %v982
        %1008 = vmatpush1.bf16.msra.mxu0 %v981
        %1009 = vmatprep.subr.bf16.mxu0 0
        %1010 = vmatpush1.bf16.msra.mxu0 0
        %1011 = vmatprep.subr.bf16.mxu0 0
        %1012 = vmatpush1.bf16.msra.mxu0 0
        %1013 = vmatprep.subr.bf16.mxu0 0
        %1014 = vmatpush1.bf16.msra.mxu0 0
        %1015 = vmatprep.subr.bf16.mxu0 0
        %1016 = vmatpush1.bf16.msra.mxu0 0
        %1017 = vmatprep.subr.bf16.mxu0 0
        %1018 = vmatpush1.bf16.msra.mxu0 0
        %1019 = vmatprep.subr.bf16.mxu0 0
        %1020 = vmatpush1.bf16.msra.mxu0 0
        %1021 = vmatprep.subr.bf16.mxu0 0
        %1022 = vmatpush1.bf16.msra.mxu0 0
        %1023 = vmatprep.subr.bf16.mxu0 0
        %1024 = vmatpush1.bf16.msra.mxu0 0
        %1025 = vmatprep.subr.bf16.mxu0 0
        %1026 = vmatpush1.bf16.msra.mxu0 0
        %1027 = vmatprep.subr.bf16.mxu0 0
        %1028 = vmatpush1.bf16.msra.mxu0 0
        %1029 = vmatprep.subr.bf16.mxu0 0
        %1030 = vmatpush1.bf16.msra.mxu0 0
        %1031 = vmatprep.subr.bf16.mxu0 0
        %1032 = vmatpush1.bf16.msra.mxu0 0
        %1033 = vmatprep.subr.bf16.mxu0 0
        %1034 = vmatpush1.bf16.msra.mxu0 0
        %1035 = vmatprep.subr.bf16.mxu0 0
        %1036 = vmatpush1.bf16.msra.mxu0 0
        %1037 = vmatprep.mubr.bf16.mxu0 0
        %1038 = vmatmul.mubr.bf16.gmra.mrb[0].mxu0 %v1003
        %v1039 = vpop.f32.mrb[0].mxu0
        %v1040 = vadd.f32 %v990, %v1039
        %v1041 = vpop.f32.mrb[0].mxu0
        %v1042 = vadd.f32 %v990, %v1041
        %v1043 = vpop.f32.mrb[0].mxu0
        %v1044 = vadd.f32 %v995, %v1043
        %v1045 = vpop.f32.mrb[0].mxu0
        %v1046 = vadd.f32 %v995, %v1045
        %1047 = vdwg.mxu0
        %1048 = vst [vmem:[%s388] sm:$0xff] %v1040
        %1049 = vst [vmem:[%s388 + $0x8] sm:$0xff] %v1042
        %1050 = vst [vmem:[%s388 + $0x10] sm:$0xff] %v1044
        %1051 = vst [vmem:[%s388 + $0x18] sm:$0xff] %v1046
        %s1052 = sand.u32 %s236, 1
        %s1053 = scalar_lea.sflag [#allocation4], %s1052
        %s1054 = sand.u32 %s236, 1
        %s1055 = smul.addr %s1054, 32
        %s1056 = scalar_lea.vmem [#allocation3], %s1055
        %s1057 = sand.u32 %s264, 1
        %s1058 = scalar_lea.sflag [#allocation6], %s1057
        %s1059 = sand.u32 %s264, 1
        %s1060 = smul.addr %s1059, 2
        %s1061 = scalar_lea.vmem [#allocation5], %s1060
        // Predicated region
        $region53: #{tpu_custom_call.1} parent=51 // pred_check
          %p1062 = pneg %p246
        $region54: #{tpu_custom_call.1} parent=51 // pred_check_branch
          %1064 = sbr.rel (%p1062) target = $region56
        $region55: #{tpu_custom_call.1} parent=51 // pred_region
          %s1065 = smul.u32 2, %s34
          %s1067 = ssub.s32 512, 512
          %1068 = vsyncadd %s1053, %s1067
          %s1069 = smul.addr %s33, 4
          %s1070 = sadd.s32 %s1065, %s1069
          %s1071 = smul.addr %s1070, 128
          %s1072 = scalar_lea.hbm %s8, %s1071
          %s1073 = sshll.u32 %s1056, 4
          %s1074 = int_to_ptr.vmem [resolvable:$true] %s1073
          %1079 = dma.vmem_to_hbm [thread:$0]  %s1074, 512, %s1072, %s1053, 256, 256, 16
        $region56: #{tpu_custom_call.1} parent=51 // pred_fallthru
          _
        // Predicated region
        $region57: #{tpu_custom_call.1} parent=51 // pred_check
          %p1080 = pneg %p274
        $region58: #{tpu_custom_call.1} parent=51 // pred_check_branch
          %1082 = sbr.rel (%p1080) target = $region60
        $region59: #{tpu_custom_call.1} parent=51 // pred_region
          %s1083 = smul.u32 2, %s34
          %s1085 = ssub.s32 32, 32
          %1086 = vsyncadd %s1058, %s1085
          %s1087 = smul.addr %s33, 2
          %s1088 = sadd.s32 %s1083, %s1087
          %s1089 = smul.addr %s1088, 16
          %s1090 = scalar_lea.hbm %s9, %s1089
          %s1092 = sshll.u32 %s1061, 4
          %s1093 = int_to_ptr.vmem [resolvable:$true] %s1092
          %1095 = dma.vmem_to_hbm [thread:$0]  %s1093, 32, %s1090, %s1058
        $region60: #{tpu_custom_call.1} parent=51 // pred_fallthru
          _
      $region52: #{tpu_custom_call.1} parent=5 // pred_fallthru
        _
      %p1096 = scmp.le.s32.totalorder 2, %s24
      // Predicated region
      $region61: #{tpu_custom_call.1} parent=5 // pred_check
        %p1097 = pneg %p1096
      $region62: #{tpu_custom_call.1} parent=5 // pred_check_branch
        %1099 = sbr.rel (%p1097) target = $region64
      $region63: #{tpu_custom_call.1} parent=5 // pred_region
        %s1100 = ssub.s32 %s24, 2
        // Predicated region
        $region65: #{tpu_custom_call.1} parent=63 // pred_check
          %p1101 = pneg %p252
        $region66: #{tpu_custom_call.1} parent=63 // pred_check_branch
          %1103 = sbr.rel (%p1101) target = $region68
        $region67: #{tpu_custom_call.1} parent=63 // pred_region
          %s1104 = sand.u32 %s237, 1
          %s1105 = scalar_lea.sflag [#allocation4], %s1104
          %s1106 = sand.u32 %s237, 1
          %s1107 = smul.addr %s1106, 32
          %s1108 = scalar_lea.vmem [#allocation3], %s1107
          %1109 = dma.done %s1105, 512
        $region68: #{tpu_custom_call.1} parent=63 // pred_fallthru
          _
        // Predicated region
        $region69: #{tpu_custom_call.1} parent=63 // pred_check
          %p1110 = pneg %p280
        $region70: #{tpu_custom_call.1} parent=63 // pred_check_branch
          %1112 = sbr.rel (%p1110) target = $region72
        $region71: #{tpu_custom_call.1} parent=63 // pred_region
          %s1113 = sand.u32 %s265, 1
          %s1114 = scalar_lea.sflag [#allocation6], %s1113
          %s1115 = sand.u32 %s265, 1
          %s1116 = smul.addr %s1115, 2
          %s1117 = scalar_lea.vmem [#allocation5], %s1116
          %1118 = dma.done %s1114, 32
        $region72: #{tpu_custom_call.1} parent=63 // pred_fallthru
          _
      $region64: #{tpu_custom_call.1} parent=5 // pred_fallthru
        _
    $region6: #{tpu_custom_call.1} parent=1 // loop_footer
      %s28 = sadd.s32 1, %s24
    $region7: #{tpu_custom_call.1} parent=1 // loop_footer_branch
      %23 = sbr.rel target = $region3
    $region8: #{tpu_custom_call.1} parent=1 // loop_exit
      _
    %1119 = vsyncpa [#allocation4], 1
    %s1120 = scalar_lea.sflag [#allocation4], 1
    %1121 = vsyncpa %s1120, 1
    %1122 = vsyncpa [#allocation6], 1
    %s1123 = scalar_lea.sflag [#allocation6], 1
    %1124 = vsyncpa %s1123, 1

</llo_original>
